<compile_context>
chip_gen: v7x
topology: tpu7x:2x2x1
jax: 0.10.0
libtpu: 0.0.40
codegen_flags: <defaults>
</compile_context>

<pallas_src>
import jax
import jax.numpy as jnp
from jax.experimental import pallas as pl
from jax.experimental.pallas import tpu as pltpu


def _round_up(n, m):
    return ((n + m - 1) // m) * m


def mlp_kernel(x_ref, w1_ref, b1_ref, w2_ref, b2_ref, o_ref, h_ref):
    # Hidden layer: bf16 operands on the MXU, f32 accumulation.
    h = jnp.dot(x_ref[...], w1_ref[...], preferred_element_type=jnp.float32)
    # Bias add + ReLU in f32 on the VPU; stash the (TB, H) activation in VMEM
    # scratch so it is never held as a huge traced value in vregs.
    h_ref[...] = jnp.maximum(h + b1_ref[...], 0.0)
    # Output layer: cast activation to bf16 for the MXU, accumulate in f32,
    # store a lane-dense (TB, OUT_P) tile.
    y = jnp.dot(h_ref[...].astype(jnp.bfloat16), w2_ref[...],
                preferred_element_type=jnp.float32)
    o_ref[...] = (y + b2_ref[...]).astype(o_ref.dtype)


def mlp_forward(x, w1, b1, w2, b2, *, max_batch_tile=256):
    B, IN = x.shape
    H = w1.shape[1]
    OUT = w2.shape[1]

    IN_P = _round_up(IN, 128)     # clean K for the first MXU pass
    H_P = _round_up(H, 128)
    OUT_P = _round_up(OUT, 128)   # lane-dense output stores
    TB = min(max_batch_tile, _round_up(B, 8))  # f32 sublane multiple
    B_P = _round_up(B, TB)

    # Zero-pad: padded x cols / w1 rows / w2 cols / b2 lanes contribute exactly
    # zero, and padded output rows/lanes are sliced off below.
    x_p = jnp.zeros((B_P, IN_P), jnp.bfloat16).at[:B, :IN].set(x.astype(jnp.bfloat16))
    w1_p = jnp.zeros((IN_P, H_P), jnp.bfloat16).at[:IN, :H].set(w1.astype(jnp.bfloat16))
    b1_p = jnp.zeros((1, H_P), jnp.float32).at[:, :H].set(b1.astype(jnp.float32))
    w2_p = jnp.zeros((H_P, OUT_P), jnp.bfloat16).at[:H, :OUT].set(w2.astype(jnp.bfloat16))
    b2_p = jnp.zeros((1, OUT_P), jnp.float32).at[:, :OUT].set(b2.astype(jnp.float32))

    out = pl.pallas_call(
        mlp_kernel,
        out_shape=jax.ShapeDtypeStruct((B_P, OUT_P), jnp.float32),
        grid=(B_P // TB,),
        in_specs=[
            pl.BlockSpec((TB, IN_P), lambda i: (i, 0)),    # x: tiled over batch
            pl.BlockSpec((IN_P, H_P), lambda i: (0, 0)),   # weights/biases stay
            pl.BlockSpec((1, H_P), lambda i: (0, 0)),      # VMEM-resident across
            pl.BlockSpec((H_P, OUT_P), lambda i: (0, 0)),  # batch tiles
            pl.BlockSpec((1, OUT_P), lambda i: (0, 0)),
        ],
        out_specs=pl.BlockSpec((TB, OUT_P), lambda i: (i, 0)),
        scratch_shapes=[pltpu.VMEM((TB, H_P), jnp.float32)],
        compiler_params=pltpu.CompilerParams(
            # Batch tiles are independent -> shard across TensorCores on v7x.
            dimension_semantics=("parallel",),
        ),
    )(x_p, w1_p, b1_p, w2_p, b2_p)
    return out[:B, :OUT]


def init_params(key, in_dim=20, hidden=256, out_dim=10):
    # Deterministic init mimicking nn.Linear's U(-1/sqrt(fan_in), 1/sqrt(fan_in)).
    k1, k2, k3, k4 = jax.random.split(key, 4)
    bound1 = 1.0 / jnp.sqrt(in_dim)
    bound2 = 1.0 / jnp.sqrt(hidden)
    w1 = jax.random.uniform(k1, (in_dim, hidden), jnp.float32, -bound1, bound1)
    b1 = jax.random.uniform(k2, (1, hidden), jnp.float32, -bound1, bound1)
    w2 = jax.random.uniform(k3, (hidden, out_dim), jnp.float32, -bound2, bound2)
    b2 = jax.random.uniform(k4, (1, out_dim), jnp.float32, -bound2, bound2)
    return w1, b1, w2, b2


if __name__ == "__main__":
    key = jax.random.PRNGKey(0)
    kx, kp = jax.random.split(key)
    x = jax.random.uniform(kx, (2, 20), jnp.float32)  # like torch.rand(2, 20)
    w1, b1, w2, b2 = init_params(kp)

    y = mlp_forward(x, w1, b1, w2, b2)
    jax.block_until_ready(y)

    # Matched-precision reference (bf16 MXU operands, f32 accumulation/epilogue).
    h_ref = jnp.dot(x.astype(jnp.bfloat16), w1.astype(jnp.bfloat16),
                    preferred_element_type=jnp.float32) + b1
    h_ref = jnp.maximum(h_ref, 0.0)
    ref_bf16 = jnp.dot(h_ref.astype(jnp.bfloat16), w2.astype(jnp.bfloat16),
                       preferred_element_type=jnp.float32) + b2
    # Pure-f32 reference (loose check: bf16 inputs cost ~0.4% relative error).
    ref_f32 = jnp.maximum(x @ w1 + b1, 0.0) @ w2 + b2

    assert y.shape == (2, 10)
    assert jnp.allclose(y, ref_bf16, atol=1e-4, rtol=1e-4)
    assert jnp.allclose(y, ref_f32, atol=3e-2, rtol=3e-2)
    print("KERNEL_OK")
</pallas_src>

<mosaic_0001>
module attributes {stable_mosaic.version = 11 : i64} {
  func.func @mlp_kernel(%arg0: i32, %arg1: memref<8x128xbf16, #tpu.memory_space<vmem>>, %arg2: memref<128x256xbf16, #tpu.memory_space<vmem>>, %arg3: memref<1x256xf32, #tpu.memory_space<vmem>>, %arg4: memref<256x128xbf16, #tpu.memory_space<vmem>>, %arg5: memref<1x128xf32, #tpu.memory_space<vmem>>, %arg6: memref<8x128xf32, #tpu.memory_space<vmem>>, %arg7: memref<8x256xf32, #tpu.memory_space<vmem>>) attributes {dimension_semantics = [#tpu.dimension_semantics<parallel>], iteration_bounds = array<i64: 1>, scalar_prefetch = 0 : i64, scratch_operands = 1 : i64, tpu.core_type = #tpu.core_type<tc>, window_params = [{transform_indices = @transform_0, window_bounds = array<i64: 8, 128>}, {pipeline_mode = #tpu.pipeline_mode<synchronous>, transform_indices = @transform_1, window_bounds = array<i64: 128, 256>}, {pipeline_mode = #tpu.pipeline_mode<synchronous>, transform_indices = @transform_2, window_bounds = array<i64: 1, 256>}, {pipeline_mode = #tpu.pipeline_mode<synchronous>, transform_indices = @transform_3, window_bounds = array<i64: 256, 128>}, {pipeline_mode = #tpu.pipeline_mode<synchronous>, transform_indices = @transform_4, window_bounds = array<i64: 1, 128>}, {transform_indices = @transform_5, window_bounds = array<i64: 8, 128>}]} {
    %c0 = arith.constant 0 : index
    %c0_0 = arith.constant 0 : index
    %0 = vector.load %arg1[%c0, %c0_0] : memref<8x128xbf16, #tpu.memory_space<vmem>>, vector<8x128xbf16>
    %c0_1 = arith.constant 0 : index
    %c0_2 = arith.constant 0 : index
    %1 = vector.load %arg2[%c0_1, %c0_2] : memref<128x256xbf16, #tpu.memory_space<vmem>>, vector<128x256xbf16>
    %cst = arith.constant dense<0.000000e+00> : vector<8x256xf32>
    %2 = tpu.matmul %0, %1, %cst {dimension_numbers = #tpu.dot_dimension_numbers<[1], [0], [0], [1], [0, 0, 1, 1], [], []>} : vector<8x128xbf16>, vector<128x256xbf16>, vector<8x256xf32> -> vector<8x256xf32>
    %c0_3 = arith.constant 0 : index
    %c0_4 = arith.constant 0 : index
    %3 = vector.load %arg3[%c0_3, %c0_4] : memref<1x256xf32, #tpu.memory_space<vmem>>, vector<1x256xf32>
    %4 = vector.broadcast %3 : vector<1x256xf32> to vector<8x256xf32>
    %5 = arith.addf %2, %4 : vector<8x256xf32>
    %cst_5 = arith.constant 0.000000e+00 : f32
    %6 = vector.broadcast %cst_5 : f32 to vector<8x256xf32>
    %7 = arith.maximumf %5, %6 : vector<8x256xf32>
    %c0_6 = arith.constant 0 : index
    %c0_7 = arith.constant 0 : index
    %8 = vector.load %arg7[%c0_6, %c0_7] : memref<8x256xf32, #tpu.memory_space<vmem>>, vector<8x256xf32>
    tpu.vector_store %arg7[%c0_6, %c0_7], %7 {strides = array<i32>} : memref<8x256xf32, #tpu.memory_space<vmem>>, vector<8x256xf32>,
    %c0_8 = arith.constant 0 : index
    %c0_9 = arith.constant 0 : index
    %9 = vector.load %arg7[%c0_8, %c0_9] : memref<8x256xf32, #tpu.memory_space<vmem>>, vector<8x256xf32>
    %10 = arith.truncf %9 : vector<8x256xf32> to vector<8x256xbf16>
    %c0_10 = arith.constant 0 : index
    %c0_11 = arith.constant 0 : index
    %11 = vector.load %arg4[%c0_10, %c0_11] : memref<256x128xbf16, #tpu.memory_space<vmem>>, vector<256x128xbf16>
    %cst_12 = arith.constant dense<0.000000e+00> : vector<8x128xf32>
    %12 = tpu.matmul %10, %11, %cst_12 {dimension_numbers = #tpu.dot_dimension_numbers<[1], [0], [0], [1], [0, 0, 1, 1], [], []>} : vector<8x256xbf16>, vector<256x128xbf16>, vector<8x128xf32> -> vector<8x128xf32>
    %c0_13 = arith.constant 0 : index
    %c0_14 = arith.constant 0 : index
    %13 = vector.load %arg5[%c0_13, %c0_14] : memref<1x128xf32, #tpu.memory_space<vmem>>, vector<1x128xf32>
    %14 = vector.broadcast %13 : vector<1x128xf32> to vector<8x128xf32>
    %15 = arith.addf %12, %14 : vector<8x128xf32>
    %c0_15 = arith.constant 0 : index
    %c0_16 = arith.constant 0 : index
    %16 = vector.load %arg6[%c0_15, %c0_16] : memref<8x128xf32, #tpu.memory_space<vmem>>, vector<8x128xf32>
    tpu.vector_store %arg6[%c0_15, %c0_16], %15 {strides = array<i32>} : memref<8x128xf32, #tpu.memory_space<vmem>>, vector<8x128xf32>,
    return
  }
  func.func @transform_0(%arg0: i32) -> (i32, i32) {
    %c0_i32 = arith.constant 0 : i32
    %c0_i32_0 = arith.constant 0 : i32
    return %arg0, %c0_i32 : i32, i32
  }
  func.func @transform_1(%arg0: i32) -> (i32, i32) {
    %c0_i32 = arith.constant 0 : i32
    %c0_i32_0 = arith.constant 0 : i32
    %c0_i32_1 = arith.constant 0 : i32
    return %c0_i32, %c0_i32_0 : i32, i32
  }
  func.func @transform_2(%arg0: i32) -> (i32, i32) {
    %c0_i32 = arith.constant 0 : i32
    %c0_i32_0 = arith.constant 0 : i32
    %c0_i32_1 = arith.constant 0 : i32
    return %c0_i32, %c0_i32_0 : i32, i32
  }
  func.func @transform_3(%arg0: i32) -> (i32, i32) {
    %c0_i32 = arith.constant 0 : i32
    %c0_i32_0 = arith.constant 0 : i32
    %c0_i32_1 = arith.constant 0 : i32
    return %c0_i32, %c0_i32_0 : i32, i32
  }
  func.func @transform_4(%arg0: i32) -> (i32, i32) {
    %c0_i32 = arith.constant 0 : i32
    %c0_i32_0 = arith.constant 0 : i32
    %c0_i32_1 = arith.constant 0 : i32
    return %c0_i32, %c0_i32_0 : i32, i32
  }
  func.func @transform_5(%arg0: i32) -> (i32, i32) {
    %c0_i32 = arith.constant 0 : i32
    %c0_i32_0 = arith.constant 0 : i32
    return %arg0, %c0_i32 : i32, i32
  }
}

</mosaic_0001>

<llo_original>
// kernel: tpu_custom_call.1
$region0: #{tpu_custom_call.1}
  #allocation0 [shape = 'u32[]', space=smem, size = 0x4, offset = 0x4, fixed_abs, tag = 'smem constant byte address 0x4 - core index']
  #allocation1 [shape = 'u32[144,128]{1,0:T(1,128)}', space=vmem, size = 0x12000, scoped, tag = 'internal scratch']
  #allocation2 [shape = 'f32[8,256]{1,0:T(8,128)}', space=vmem, size = 0x2000, scoped, tag = 'scratch operand']
  %s0 = inlined_call_operand.hbm [shape: bf16[8,128], index: 0, kind: input, shape index: {}]
  %s1 = inlined_call_operand.hbm [shape: bf16[128,256], index: 1, kind: input, shape index: {}]
  %s2 = inlined_call_operand.vmem [shape: f32[1,256], index: 2, kind: input, shape index: {}]
  %s3 = inlined_call_operand.hbm [shape: bf16[256,128], index: 3, kind: input, shape index: {}]
  %s4 = inlined_call_operand.vmem [shape: f32[1,128], index: 4, kind: input, shape index: {}]
  %s5 = inlined_call_operand.hbm [shape: f32[8,128], index: 5, kind: output, shape index: {}]
  %s6 = sld [smem:[#allocation0]]
  $region42: #{tpu_custom_call.1} parent=0
    _
  %s8 = ssub.s32 1, %s6
  %s9 = scalar_select 0, %s8, %s6
  $region1: #{tpu_custom_call.1} parent=0
    #allocation3 [shape = 'u8[2048]{0}', space=vmem, size = 0x800, scoped, tag = 'input window, operand 0, single buffered']
    #allocation4 [shape = 's32[1]{0}', space=sflag, size = 0x4, scoped, tag = 'scoped memory for tpu_custom_call.1']
    #allocation5 [shape = 's32[1]{0}', space=sflag, size = 0x4, scoped, tag = 'scoped memory for tpu_custom_call.1']
    #allocation6 [shape = 'u8[65536]{0}', space=vmem, size = 0x10000, scoped, tag = 'input window, operand 1, single buffered']
    #allocation7 [shape = 's32[1]{0}', space=sflag, size = 0x4, scoped, tag = 'scoped memory for tpu_custom_call.1']
    #allocation8 [shape = 'u8[65536]{0}', space=vmem, size = 0x10000, scoped, tag = 'input window, operand 3, single buffered']
    #allocation9 [shape = 'u8[4096]{0}', space=vmem, size = 0x1000, scoped, tag = 'output window, operand 0, single buffered']
    %10 = vsyncpa [#allocation4], 0
    %11 = vsyncpa [#allocation7], 0
    %12 = vsyncpa [#allocation5], 0
    // Predicated region
    $region2: #{tpu_custom_call.1} parent=1 // pred_check
      _
    $region3: #{tpu_custom_call.1} parent=1 // pred_check_branch
      %14 = sbr.rel (0) target = $region5
    $region4: #{tpu_custom_call.1} parent=1 // pred_region
      %s16 = ssub.s32 64, 64
      %17 = vsyncadd [#allocation4], %s16
      %s19 = sshll.u32 [#allocation3], 4
      %s20 = int_to_ptr.vmem [resolvable:$true] %s19
      %22 = dma.hbm_to_vmem [thread:$0]  %s0, 64, %s20, [#allocation4]
    $region5: #{tpu_custom_call.1} parent=1 // pred_fallthru
      _
    // Predicated region
    $region6: #{tpu_custom_call.1} parent=1 // pred_check
      _
    $region7: #{tpu_custom_call.1} parent=1 // pred_check_branch
      %24 = sbr.rel (0) target = $region9
    $region8: #{tpu_custom_call.1} parent=1 // pred_region
      %s26 = ssub.s32 2048, 2048
      %27 = vsyncadd [#allocation7], %s26
      %s28 = sshll.u32 [#allocation6], 4
      %s29 = int_to_ptr.vmem [resolvable:$true] %s28
      %34 = dma.hbm_to_vmem [thread:$0]  %s1, 2048, %s29, [#allocation7], 128, 128, 8
    $region9: #{tpu_custom_call.1} parent=1 // pred_fallthru
      _
    // Predicated region
    $region10: #{tpu_custom_call.1} parent=1 // pred_check
      _
    $region11: #{tpu_custom_call.1} parent=1 // pred_check_branch
      %36 = sbr.rel (0) target = $region13
    $region12: #{tpu_custom_call.1} parent=1 // pred_region
      _
    $region13: #{tpu_custom_call.1} parent=1 // pred_fallthru
      _
    // Predicated region
    $region14: #{tpu_custom_call.1} parent=1 // pred_check
      _
    $region15: #{tpu_custom_call.1} parent=1 // pred_check_branch
      %38 = sbr.rel (0) target = $region17
    $region16: #{tpu_custom_call.1} parent=1 // pred_region
      %s40 = ssub.s32 2048, 2048
      %41 = vsyncadd [#allocation7], %s40
      %s42 = sshll.u32 [#allocation8], 4
      %s43 = int_to_ptr.vmem [resolvable:$true] %s42
      %48 = dma.hbm_to_vmem [thread:$0]  %s3, 2048, %s43, [#allocation7], 64, 64, 4
    $region17: #{tpu_custom_call.1} parent=1 // pred_fallthru
      _
    // Predicated region
    $region18: #{tpu_custom_call.1} parent=1 // pred_check
      _
    $region19: #{tpu_custom_call.1} parent=1 // pred_check_branch
      %50 = sbr.rel (0) target = $region21
    $region20: #{tpu_custom_call.1} parent=1 // pred_region
      _
    $region21: #{tpu_custom_call.1} parent=1 // pred_fallthru
      _
    // Predicated region
    $region22: #{tpu_custom_call.1} parent=1 // pred_check
      _
    $region23: #{tpu_custom_call.1} parent=1 // pred_check_branch
      %52 = sbr.rel (0) target = $region25
    $region24: #{tpu_custom_call.1} parent=1 // pred_region
      %53 = dma.done [#allocation4], 64
    $region25: #{tpu_custom_call.1} parent=1 // pred_fallthru
      _
    // Predicated region
    $region26: #{tpu_custom_call.1} parent=1 // pred_check
      _
    $region27: #{tpu_custom_call.1} parent=1 // pred_check_branch
      %55 = sbr.rel (0) target = $region29
    $region28: #{tpu_custom_call.1} parent=1 // pred_region
      %56 = dma.done [#allocation7], 2048
    $region29: #{tpu_custom_call.1} parent=1 // pred_fallthru
      _
    // Predicated region
    $region30: #{tpu_custom_call.1} parent=1 // pred_check
      _
    $region31: #{tpu_custom_call.1} parent=1 // pred_check_branch
      %58 = sbr.rel (0) target = $region33
    $region32: #{tpu_custom_call.1} parent=1 // pred_region
      %59 = dma.done [#allocation7], 2048
    $region33: #{tpu_custom_call.1} parent=1 // pred_fallthru
      _
    %v61 = vld [vmem:[#allocation3] sm:$0xf]
    %v62 = vld [vmem:[#allocation6] sm:$0xff]
    %v63 = vld [vmem:[#allocation6 + $0x8] sm:$0xff]
    %v64 = vld [vmem:[#allocation6 + $0x10] sm:$0xff]
    %v65 = vld [vmem:[#allocation6 + $0x18] sm:$0xff]
    %v66 = vld [vmem:[#allocation6 + $0x20] sm:$0xff]
    %v67 = vld [vmem:[#allocation6 + $0x28] sm:$0xff]
    %v68 = vld [vmem:[#allocation6 + $0x30] sm:$0xff]
    %v69 = vld [vmem:[#allocation6 + $0x38] sm:$0xff]
    %v70 = vld [vmem:[#allocation6 + $0x40] sm:$0xff]
    %v71 = vld [vmem:[#allocation6 + $0x48] sm:$0xff]
    %v72 = vld [vmem:[#allocation6 + $0x50] sm:$0xff]
    %v73 = vld [vmem:[#allocation6 + $0x58] sm:$0xff]
    %v74 = vld [vmem:[#allocation6 + $0x60] sm:$0xff]
    %v75 = vld [vmem:[#allocation6 + $0x68] sm:$0xff]
    %v76 = vld [vmem:[#allocation6 + $0x70] sm:$0xff]
    %v77 = vld [vmem:[#allocation6 + $0x78] sm:$0xff]
    %v78 = vld [vmem:[%s2] sm:$0x3]
    %v80 = vlaneseq
    %v81 = vshrl.u32 %v80, 7
    %v82 = vsub.s32 0, %v81
    %v83 = vrot.slane %v78, %v82
    %v84 = vlaneseq
    %v85 = vshrl.u32 %v84, 7
    %v86 = vsub.s32 1, %v85
    %v87 = vrot.slane %v78, %v86
    %v106 = vunpack.c.l.b16 %v62
    %v107 = vunpack.c.h.b16 %v62
    %v108 = vunpack.c.l.b16 %v63
    %v109 = vunpack.c.h.b16 %v63
    %v110 = vunpack.c.l.b16 %v64
    %v111 = vunpack.c.h.b16 %v64
    %v112 = vunpack.c.l.b16 %v65
    %v113 = vunpack.c.h.b16 %v65
    %v114 = vunpack.c.l.b16 %v66
    %v115 = vunpack.c.h.b16 %v66
    %v116 = vunpack.c.l.b16 %v67
    %v117 = vunpack.c.h.b16 %v67
    %v118 = vunpack.c.l.b16 %v68
    %v119 = vunpack.c.h.b16 %v68
    %v120 = vunpack.c.l.b16 %v69
    %v121 = vunpack.c.h.b16 %v69
    %v122 = vunpack.c.l.b16 %v70
    %v123 = vunpack.c.h.b16 %v70
    %v124 = vunpack.c.l.b16 %v71
    %v125 = vunpack.c.h.b16 %v71
    %v126 = vunpack.c.l.b16 %v72
    %v127 = vunpack.c.h.b16 %v72
    %v128 = vunpack.c.l.b16 %v73
    %v129 = vunpack.c.h.b16 %v73
    %v130 = vunpack.c.l.b16 %v74
    %v131 = vunpack.c.h.b16 %v74
    %v132 = vunpack.c.l.b16 %v75
    %v133 = vunpack.c.h.b16 %v75
    %v134 = vunpack.c.l.b16 %v76
    %v135 = vunpack.c.h.b16 %v76
    %v136 = vunpack.c.l.b16 %v77
    %v137 = vunpack.c.h.b16 %v77
    %v138 = vpack.c.b16 %v108, %v106
    %v139 = vpack.c.b16 %v109, %v107
    %v140 = vpack.c.b16 %v112, %v110
    %v141 = vpack.c.b16 %v113, %v111
    %v142 = vpack.c.b16 %v116, %v114
    %v143 = vpack.c.b16 %v117, %v115
    %v144 = vpack.c.b16 %v120, %v118
    %v145 = vpack.c.b16 %v121, %v119
    %v146 = vpack.c.b16 %v124, %v122
    %v147 = vpack.c.b16 %v125, %v123
    %v148 = vpack.c.b16 %v128, %v126
    %v149 = vpack.c.b16 %v129, %v127
    %v150 = vpack.c.b16 %v132, %v130
    %v151 = vpack.c.b16 %v133, %v131
    %v152 = vpack.c.b16 %v136, %v134
    %v153 = vpack.c.b16 %v137, %v135
    %170 = vmatprep.subr.bf16.mxu0 %v139
    %171 = vmatpush1.bf16.msra.mxu0 %v138
    %172 = vmatprep.subr.bf16.mxu0 %v141
    %173 = vmatpush1.bf16.msra.mxu0 %v140
    %174 = vmatprep.subr.bf16.mxu0 %v143
    %175 = vmatpush1.bf16.msra.mxu0 %v142
    %176 = vmatprep.subr.bf16.mxu0 %v145
    %177 = vmatpush1.bf16.msra.mxu0 %v144
    %178 = vmatprep.subr.bf16.mxu0 %v147
    %179 = vmatpush1.bf16.msra.mxu0 %v146
    %180 = vmatprep.subr.bf16.mxu0 %v149
    %181 = vmatpush1.bf16.msra.mxu0 %v148
    %182 = vmatprep.subr.bf16.mxu0 %v151
    %183 = vmatpush1.bf16.msra.mxu0 %v150
    %184 = vmatprep.subr.bf16.mxu0 %v153
    %185 = vmatpush1.bf16.msra.mxu0 %v152
    %186 = vmatprep.subr.bf16.mxu0 0
    %187 = vmatpush1.bf16.msra.mxu0 0
    %188 = vmatprep.subr.bf16.mxu0 0
    %189 = vmatpush1.bf16.msra.mxu0 0
    %190 = vmatprep.subr.bf16.mxu0 0
    %191 = vmatpush1.bf16.msra.mxu0 0
    %192 = vmatprep.subr.bf16.mxu0 0
    %193 = vmatpush1.bf16.msra.mxu0 0
    %194 = vmatprep.subr.bf16.mxu0 0
    %195 = vmatpush1.bf16.msra.mxu0 0
    %196 = vmatprep.subr.bf16.mxu0 0
    %197 = vmatpush1.bf16.msra.mxu0 0
    %198 = vmatprep.subr.bf16.mxu0 0
    %199 = vmatpush1.bf16.msra.mxu0 0
    %200 = vmatprep.subr.bf16.mxu0 0
    %201 = vmatpush1.bf16.msra.mxu0 0
    %202 = vmatprep.mubr.bf16.mxu0 0
    %203 = vmatmul.mubr.bf16.gmra.mrb[0].mxu0 %v61
    %v204 = vpop.f32.mrb[0].mxu0
    %v205 = vadd.f32 %v83, %v204
    %v206 = vpop.f32.mrb[0].mxu0
    %v207 = vadd.f32 %v87, %v206
    %v208 = vpop.f32.mrb[0].mxu0
    %v209 = vpop.f32.mrb[0].mxu0
    %210 = vdwg.mxu0
    %v211 = vmax.f32 %v205, 0.0
    %v212 = vmax.f32 %v207, 0.0
    %213 = vst [vmem:[#allocation2] sm:$0xff] %v211
    %214 = vst [vmem:[#allocation2 + $0x8] sm:$0xff] %v212
    %v215 = vld [vmem:[#allocation2] sm:$0xff]
    %v216 = vld [vmem:[#allocation2 + $0x8] sm:$0xff]
    %v217 = vpack.c.bf16 %v215, %v215
    %v218 = vpack.c.bf16 %v216, %v216
    %v219 = vld [vmem:[#allocation8] sm:$0xf]
    %v220 = vld [vmem:[#allocation8 + $0x4] sm:$0xf]
    %v221 = vld [vmem:[#allocation8 + $0x8] sm:$0xf]
    %v222 = vld [vmem:[#allocation8 + $0xc] sm:$0xf]
    %v223 = vld [vmem:[#allocation8 + $0x10] sm:$0xf]
    %v224 = vld [vmem:[#allocation8 + $0x14] sm:$0xf]
    %v225 = vld [vmem:[#allocation8 + $0x18] sm:$0xf]
    %v226 = vld [vmem:[#allocation8 + $0x1c] sm:$0xf]
    %v227 = vld [vmem:[#allocation8 + $0x20] sm:$0xf]
    %v228 = vld [vmem:[#allocation8 + $0x24] sm:$0xf]
    %v229 = vld [vmem:[#allocation8 + $0x28] sm:$0xf]
    %v230 = vld [vmem:[#allocation8 + $0x2c] sm:$0xf]
    %v231 = vld [vmem:[#allocation8 + $0x30] sm:$0xf]
    %v232 = vld [vmem:[#allocation8 + $0x34] sm:$0xf]
    %v233 = vld [vmem:[#allocation8 + $0x38] sm:$0xf]
    %v234 = vld [vmem:[#allocation8 + $0x3c] sm:$0xf]
    %v235 = vld [vmem:[#allocation8 + $0x40] sm:$0xf]
    %v236 = vld [vmem:[#allocation8 + $0x44] sm:$0xf]
    %v237 = vld [vmem:[#allocation8 + $0x48] sm:$0xf]
    %v238 = vld [vmem:[#allocation8 + $0x4c] sm:$0xf]
    %v239 = vld [vmem:[#allocation8 + $0x50] sm:$0xf]
    %v240 = vld [vmem:[#allocation8 + $0x54] sm:$0xf]
    %v241 = vld [vmem:[#allocation8 + $0x58] sm:$0xf]
    %v242 = vld [vmem:[#allocation8 + $0x5c] sm:$0xf]
    %v243 = vld [vmem:[#allocation8 + $0x60] sm:$0xf]
    %v244 = vld [vmem:[#allocation8 + $0x64] sm:$0xf]
    %v245 = vld [vmem:[#allocation8 + $0x68] sm:$0xf]
    %v246 = vld [vmem:[#allocation8 + $0x6c] sm:$0xf]
    %v247 = vld [vmem:[#allocation8 + $0x70] sm:$0xf]
    %v248 = vld [vmem:[#allocation8 + $0x74] sm:$0xf]
    %v249 = vld [vmem:[#allocation8 + $0x78] sm:$0xf]
    %v250 = vld [vmem:[#allocation8 + $0x7c] sm:$0xf]
    %v251 = vld [vmem:[%s4] sm:$0x1]
    %v253 = vlaneseq
    %v254 = vshrl.u32 %v253, 7
    %v255 = vsub.s32 0, %v254
    %v256 = vrot.slane %v251, %v255
    %v290 = vunpack.c.l.b16 %v219
    %v291 = vunpack.c.l.b16 %v220
    %v292 = vunpack.c.l.b16 %v221
    %v293 = vunpack.c.l.b16 %v222
    %v294 = vunpack.c.l.b16 %v223
    %v295 = vunpack.c.l.b16 %v224
    %v296 = vunpack.c.l.b16 %v225
    %v297 = vunpack.c.l.b16 %v226
    %v298 = vunpack.c.l.b16 %v227
    %v299 = vunpack.c.l.b16 %v228
    %v300 = vunpack.c.l.b16 %v229
    %v301 = vunpack.c.l.b16 %v230
    %v302 = vunpack.c.l.b16 %v231
    %v303 = vunpack.c.l.b16 %v232
    %v304 = vunpack.c.l.b16 %v233
    %v305 = vunpack.c.l.b16 %v234
    %v306 = vunpack.c.l.b16 %v235
    %v307 = vunpack.c.l.b16 %v236
    %v308 = vunpack.c.l.b16 %v237
    %v309 = vunpack.c.l.b16 %v238
    %v310 = vunpack.c.l.b16 %v239
    %v311 = vunpack.c.l.b16 %v240
    %v312 = vunpack.c.l.b16 %v241
    %v313 = vunpack.c.l.b16 %v242
    %v314 = vunpack.c.l.b16 %v243
    %v315 = vunpack.c.l.b16 %v244
    %v316 = vunpack.c.l.b16 %v245
    %v317 = vunpack.c.l.b16 %v246
    %v318 = vunpack.c.l.b16 %v247
    %v319 = vunpack.c.l.b16 %v248
    %v320 = vunpack.c.l.b16 %v249
    %v321 = vunpack.c.l.b16 %v250
    %v322 = vpack.c.b16 %v291, %v290
    %v323 = vpack.c.b16 %v293, %v292
    %v324 = vpack.c.b16 %v295, %v294
    %v325 = vpack.c.b16 %v297, %v296
    %v326 = vpack.c.b16 %v299, %v298
    %v327 = vpack.c.b16 %v301, %v300
    %v328 = vpack.c.b16 %v303, %v302
    %v329 = vpack.c.b16 %v305, %v304
    %v330 = vpack.c.b16 %v307, %v306
    %v331 = vpack.c.b16 %v309, %v308
    %v332 = vpack.c.b16 %v311, %v310
    %v333 = vpack.c.b16 %v313, %v312
    %v334 = vpack.c.b16 %v315, %v314
    %v335 = vpack.c.b16 %v317, %v316
    %v336 = vpack.c.b16 %v319, %v318
    %v337 = vpack.c.b16 %v321, %v320
    %354 = vmatprep.subr.bf16.mxu0 0
    %355 = vmatpush1.bf16.msra.mxu0 %v322
    %356 = vmatprep.subr.bf16.mxu0 0
    %357 = vmatpush1.bf16.msra.mxu0 %v323
    %358 = vmatprep.subr.bf16.mxu0 0
    %359 = vmatpush1.bf16.msra.mxu0 %v324
    %360 = vmatprep.subr.bf16.mxu0 0
    %361 = vmatpush1.bf16.msra.mxu0 %v325
    %362 = vmatprep.subr.bf16.mxu0 0
    %363 = vmatpush1.bf16.msra.mxu0 %v326
    %364 = vmatprep.subr.bf16.mxu0 0
    %365 = vmatpush1.bf16.msra.mxu0 %v327
    %366 = vmatprep.subr.bf16.mxu0 0
    %367 = vmatpush1.bf16.msra.mxu0 %v328
    %368 = vmatprep.subr.bf16.mxu0 0
    %369 = vmatpush1.bf16.msra.mxu0 %v329
    %370 = vmatprep.subr.bf16.mxu0 0
    %371 = vmatpush1.bf16.msra.mxu0 %v330
    %372 = vmatprep.subr.bf16.mxu0 0
    %373 = vmatpush1.bf16.msra.mxu0 %v331
    %374 = vmatprep.subr.bf16.mxu0 0
    %375 = vmatpush1.bf16.msra.mxu0 %v332
    %376 = vmatprep.subr.bf16.mxu0 0
    %377 = vmatpush1.bf16.msra.mxu0 %v333
    %378 = vmatprep.subr.bf16.mxu0 0
    %379 = vmatpush1.bf16.msra.mxu0 %v334
    %380 = vmatprep.subr.bf16.mxu0 0
    %381 = vmatpush1.bf16.msra.mxu0 %v335
    %382 = vmatprep.subr.bf16.mxu0 0
    %383 = vmatpush1.bf16.msra.mxu0 %v336
    %384 = vmatprep.subr.bf16.mxu0 0
    %385 = vmatpush1.bf16.msra.mxu0 %v337
    %386 = vmatprep.mubr.bf16.mxu0 %v218
    %387 = vmatmul.mubr.bf16.gmra.mrb[0].mxu0 %v217
    %v388 = vpop.f32.mrb[0].mxu0
    %v389 = vadd.f32 %v256, %v388
    %v390 = vpop.f32.mrb[0].mxu0
    %v391 = vpop.f32.mrb[0].mxu0
    %v392 = vpop.f32.mrb[0].mxu0
    %393 = vdwg.mxu0
    %394 = vst [vmem:[#allocation9] sm:$0xff] %v389
    // Predicated region
    $region34: #{tpu_custom_call.1} parent=1 // pred_check
      _
    $region35: #{tpu_custom_call.1} parent=1 // pred_check_branch
      %396 = sbr.rel (0) target = $region37
    $region36: #{tpu_custom_call.1} parent=1 // pred_region
      %s398 = ssub.s32 128, 128
      %399 = vsyncadd [#allocation5], %s398
      %s401 = sshll.u32 [#allocation9], 4
      %s402 = int_to_ptr.vmem [resolvable:$true] %s401
      %404 = dma.vmem_to_hbm [thread:$0]  %s402, 128, %s5, [#allocation5]
    $region37: #{tpu_custom_call.1} parent=1 // pred_fallthru
      _
    // Predicated region
    $region38: #{tpu_custom_call.1} parent=1 // pred_check
      _
    $region39: #{tpu_custom_call.1} parent=1 // pred_check_branch
      %406 = sbr.rel (0) target = $region41
    $region40: #{tpu_custom_call.1} parent=1 // pred_region
      %407 = dma.done [#allocation5], 128
    $region41: #{tpu_custom_call.1} parent=1 // pred_fallthru
      _
    %408 = vsyncpa [#allocation4], 1
    %409 = vsyncpa [#allocation7], 1
    %410 = vsyncpa [#allocation5], 1

</llo_original>
